<compile_context>
chip_gen: v5e
topology: v5e:2x2
jax: 0.10.0
libtpu: 0.0.40
codegen_flags: <defaults>
</compile_context>

<pallas_src>
import math

import jax
import jax.numpy as jnp
from jax.experimental import pallas as pl
from jax.experimental.pallas import tpu as pltpu

LANES = 128
MAX_TILE_ROWS = 2048     # f32 tile = 1 MiB; 2 inputs x 2 buffers = 4 MiB VMEM
CHUNK_ROWS = 128         # fused inner-loop chunk (intermediates stay in vregs)
NUM_ACC = 4              # [sum(p*t), sum(p), sum(t), sum(bce)]


def _round_up(x, m):
    return ((x + m - 1) // m) * m


def _sublane_multiple(dtype):
    bits = jnp.dtype(dtype).itemsize * 8
    return max(8, 256 // bits)       # f32 -> 8, bf16/f16 -> 16, 8-bit -> 32


def _make_kernel(*, tile_rows, chunk_rows, full_rows, rem_cols, masked):
    """Build the reduction kernel for one static tiling configuration."""
    num_chunks = tile_rows // chunk_rows
    unroll = math.gcd(num_chunks, 4)          # always divides the trip count

    def kernel(x_ref, t_ref, acc_ref):
        step = pl.program_id(0)

        @pl.when(step == 0)
        def _():
            acc_ref[...] = jnp.zeros_like(acc_ref)

        def fold(v):
            # (chunk_rows, 128) -> (8, 128) via VPU adds (vreg-aligned reshape).
            return jnp.sum(v.reshape(-1, 8, LANES), axis=0)

        def body(c, carry):
            s_pt, s_p, s_t, s_bce = carry
            r0 = pl.multiple_of(c * chunk_rows, 8)
            x = x_ref[pl.ds(r0, chunk_rows), :].astype(jnp.float32)
            t = t_ref[pl.ds(r0, chunk_rows), :].astype(jnp.float32)

            if masked:
                # Global row index of every element in this chunk.
                grow = (step * tile_rows + r0
                        + jax.lax.broadcasted_iota(
                            jnp.int32, (chunk_rows, LANES), 0))
                valid = grow < full_rows
                if rem_cols:
                    col = jax.lax.broadcasted_iota(
                        jnp.int32, (chunk_rows, LANES), 1)
                    valid = valid | ((grow == full_rows) & (col < rem_cols))
                # exp(-88) underflows to ~0 in f32 => p == 0 and bce == 0 for
                # masked elements; dtype-safe (applied after the f32 cast).
                x = jnp.where(valid, x, jnp.float32(-88.0))
                t = jnp.where(valid, t, jnp.float32(0.0))

            e = jnp.exp(-jnp.abs(x))                        # shared transcendental
            p = jnp.where(x >= 0.0, 1.0, e) / (1.0 + e)     # stable sigmoid
            # Stable BCE-with-logits: max(x,0) - x*t + log1p(exp(-|x|)).
            bce = jnp.maximum(x, 0.0) - x * t + jnp.log1p(e)

            return (s_pt + fold(p * t), s_p + fold(p),
                    s_t + fold(t), s_bce + fold(bce))

        zero = jnp.zeros((8, LANES), jnp.float32)
        s_pt, s_p, s_t, s_bce = jax.lax.fori_loop(
            0, num_chunks, body, (zero, zero, zero, zero), unroll=unroll)

        acc_ref[0] += s_pt     # dice intersection: sum(sigmoid(x) * t)
        acc_ref[1] += s_p      # sum(sigmoid(x))
        acc_ref[2] += s_t      # sum(t)
        acc_ref[3] += s_bce    # sum of per-element BCE terms

    return kernel


def combined_loss(inputs, targets, *, weight_dice=1.0, weight_bce=1.0,
                  smooth=1.0):
    """Pallas equivalent of CombinedLoss.forward (returns a scalar f32)."""
    n = inputs.size
    x = inputs.reshape(-1)            # keep native dtype (no host-side upcast)
    t = targets.reshape(-1)

    rem_cols = n % LANES
    if rem_cols:
        # Rare path (n not a multiple of 128): tiny tail pad so the lane-dense
        # (rows, 128) reshape exists.  The pad value is irrelevant because the
        # kernel masks every element with (row, col) index past n.
        pad = LANES - rem_cols
        x = jnp.pad(x, (0, pad))
        t = jnp.pad(t, (0, pad))

    rows = pl.cdiv(n, LANES)          # rows actually present in the arrays
    full_rows = n // LANES            # rows fully filled with real data

    row_align = max(_sublane_multiple(x.dtype), _sublane_multiple(t.dtype))
    tile_rows = min(MAX_TILE_ROWS, _round_up(rows, row_align))
    chunk_rows = min(CHUNK_ROWS, tile_rows)
    tile_rows = _round_up(tile_rows, chunk_rows)   # chunk loop divides evenly
    steps = pl.cdiv(rows, tile_rows)

    # Masking is only compiled in when the grid can touch out-of-range data.
    masked = (rem_cols != 0) or (rows % tile_rows != 0)

    x2 = x.reshape(rows, LANES)
    t2 = t.reshape(rows, LANES)

    kernel = _make_kernel(tile_rows=tile_rows, chunk_rows=chunk_rows,
                          full_rows=full_rows, rem_cols=rem_cols,
                          masked=masked)

    partials = pl.pallas_call(
        kernel,
        out_shape=jax.ShapeDtypeStruct((NUM_ACC, 8, LANES), jnp.float32),
        grid_spec=pltpu.PrefetchScalarGridSpec(
            num_scalar_prefetch=0,
            grid=(steps,),
            in_specs=[
                pl.BlockSpec((tile_rows, LANES), lambda i: (i, 0)),
                pl.BlockSpec((tile_rows, LANES), lambda i: (i, 0)),
            ],
            out_specs=pl.BlockSpec((NUM_ACC, 8, LANES), lambda i: (0, 0, 0)),
        ),
        compiler_params=pltpu.CompilerParams(
            dimension_semantics=("arbitrary",),
            vmem_limit_bytes=32 * 1024 * 1024),
    )(x2, t2)

    # Tiny finalization in plain JAX: reduce the (4, 8, 128) partials once.
    sums = jnp.sum(partials, axis=(1, 2))          # (4,)
    inter, p_sum, t_sum, bce_sum = sums[0], sums[1], sums[2], sums[3]

    dice = (2.0 * inter + smooth) / (p_sum + t_sum + smooth)
    loss_dice = 1.0 - dice
    loss_bce = bce_sum / jnp.float32(n)
    return weight_dice * loss_dice + weight_bce * loss_bce


def _reference_combined_loss(inputs, targets, weight_dice=1.0, weight_bce=1.0,
                             smooth=1.0):
    x = inputs.reshape(-1).astype(jnp.float32)
    t = targets.reshape(-1).astype(jnp.float32)
    p = jax.nn.sigmoid(x)
    inter = jnp.sum(p * t)
    dice = (2.0 * inter + smooth) / (jnp.sum(p) + jnp.sum(t) + smooth)
    loss_dice = 1.0 - dice
    bce = jnp.mean(jnp.maximum(x, 0.0) - x * t
                   + jnp.log1p(jnp.exp(-jnp.abs(x))))
    return weight_dice * loss_dice + weight_bce * bce


if __name__ == "__main__":
    key = jax.random.PRNGKey(0)
    k1, k2, k3, k4 = jax.random.split(key, 4)

    # Segmentation-style inputs: logits and binary targets, NCHW.
    B, C, H, W = 2, 4, 16, 16
    logits = jax.random.normal(k1, (B, C, H, W), dtype=jnp.float32)
    targets = (jax.random.uniform(k2, (B, C, H, W)) > 0.5).astype(jnp.float32)

    loss = jax.block_until_ready(
        combined_loss(logits, targets, weight_dice=1.0, weight_bce=1.0))
    ref = _reference_combined_loss(logits, targets)
    assert jnp.allclose(loss, ref, rtol=1e-5, atol=1e-5), (loss, ref)

    # Ragged, non-128-aligned size exercises the in-kernel index mask path.
    logits2 = jax.random.normal(k3, (3, 5, 7, 11), dtype=jnp.float32)
    targets2 = (jax.random.uniform(k4, (3, 5, 7, 11)) > 0.5).astype(jnp.float32)
    loss2 = jax.block_until_ready(combined_loss(logits2, targets2))
    ref2 = _reference_combined_loss(logits2, targets2)
    assert jnp.allclose(loss2, ref2, rtol=1e-5, atol=1e-5), (loss2, ref2)

    print("KERNEL_OK")
</pallas_src>

<mosaic_0001>
module attributes {stable_mosaic.version = 11 : i64} {
  func.func @kernel(%arg0: i32, %arg1: memref<16x128xf32, #tpu.memory_space<vmem>>, %arg2: memref<16x128xf32, #tpu.memory_space<vmem>>, %arg3: memref<4x8x128xf32, #tpu.memory_space<vmem>>) attributes {dimension_semantics = [#tpu.dimension_semantics<arbitrary>], iteration_bounds = array<i64: 1>, scalar_prefetch = 0 : i64, scratch_operands = 0 : i64, tpu.core_type = #tpu.core_type<tc>, window_params = [{transform_indices = @transform_0, window_bounds = array<i64: 16, 128>}, {transform_indices = @transform_1, window_bounds = array<i64: 16, 128>}, {pipeline_mode = #tpu.pipeline_mode<synchronous>, transform_indices = @transform_2, window_bounds = array<i64: 4, 8, 128>}]} {
    %c0_i32 = arith.constant 0 : i32
    %0 = arith.cmpi eq, %arg0, %c0_i32 : i32
    %1 = arith.extui %0 : i1 to i32
    %c0_i32_0 = arith.constant 0 : i32
    %2 = arith.cmpi ne, %1, %c0_i32_0 : i32
    scf.if %2 {
      %cst_33 = arith.constant 0.000000e+00 : f32
      %64 = vector.broadcast %cst_33 : f32 to vector<4x8x128xf32>
      %c0_34 = arith.constant 0 : index
      %c0_35 = arith.constant 0 : index
      %c0_36 = arith.constant 0 : index
      %65 = vector.load %arg3[%c0_34, %c0_35, %c0_36] : memref<4x8x128xf32, #tpu.memory_space<vmem>>, vector<4x8x128xf32>
      tpu.vector_store %arg3[%c0_34, %c0_35, %c0_36], %64 {strides = array<i32>} : memref<4x8x128xf32, #tpu.memory_space<vmem>>, vector<4x8x128xf32>,
    } else {
    }
    %cst = arith.constant 0.000000e+00 : f32
    %3 = vector.broadcast %cst : f32 to vector<8x128xf32>
    %c0_i32_1 = arith.constant 0 : i32
    %c16_i32 = arith.constant 16 : i32
    %4 = arith.muli %c0_i32_1, %c16_i32 : i32
    %5 = tpu.assume_multiple %4, 8 : i32
    %6 = arith.index_cast %5 : i32 to index
    %c0 = arith.constant 0 : index
    %7 = vector.load %arg1[%6, %c0] : memref<16x128xf32, #tpu.memory_space<vmem>>, vector<16x128xf32>
    %8 = arith.index_cast %5 : i32 to index
    %c0_2 = arith.constant 0 : index
    %9 = vector.load %arg2[%8, %c0_2] : memref<16x128xf32, #tpu.memory_space<vmem>>, vector<16x128xf32>
    %10 = math.absf %7 : vector<16x128xf32>
    %cst_3 = arith.constant 0.000000e+00 : f32
    %11 = vector.broadcast %cst_3 : f32 to vector<16x128xf32>
    %12 = arith.subf %11, %10 : vector<16x128xf32>
    %13 = math.exp %12 : vector<16x128xf32>
    %cst_4 = arith.constant 0.000000e+00 : f32
    %14 = vector.broadcast %cst_4 : f32 to vector<16x128xf32>
    %15 = arith.cmpf oge, %7, %14 : vector<16x128xf32>
    %cst_5 = arith.constant 1.000000e+00 : f32
    %16 = vector.broadcast %cst_5 : f32 to vector<16x128xf32>
    %17 = arith.select %15, %16, %13 : vector<16x128xi1>, vector<16x128xf32>
    %cst_6 = arith.constant 1.000000e+00 : f32
    %18 = vector.broadcast %cst_6 : f32 to vector<16x128xf32>
    %19 = arith.addf %18, %13 : vector<16x128xf32>
    %20 = arith.divf %17, %19 : vector<16x128xf32>
    %cst_7 = arith.constant 0.000000e+00 : f32
    %21 = vector.broadcast %cst_7 : f32 to vector<16x128xf32>
    %22 = arith.maximumf %7, %21 : vector<16x128xf32>
    %23 = arith.mulf %7, %9 : vector<16x128xf32>
    %24 = arith.subf %22, %23 : vector<16x128xf32>
    %25 = math.log1p %13 : vector<16x128xf32>
    %26 = arith.addf %24, %25 : vector<16x128xf32>
    %27 = arith.mulf %20, %9 : vector<16x128xf32>
    %28 = vector.shape_cast %27 : vector<16x128xf32> to vector<2x8x128xf32>
    %cst_8 = arith.constant dense<0.000000e+00> : vector<8x128xf32>
    %29 = vector.multi_reduction <add>, %28, %cst_8 [0] : vector<2x8x128xf32> to vector<8x128xf32>
    %30 = arith.addf %3, %29 : vector<8x128xf32>
    %31 = vector.shape_cast %20 : vector<16x128xf32> to vector<2x8x128xf32>
    %cst_9 = arith.constant dense<0.000000e+00> : vector<8x128xf32>
    %32 = vector.multi_reduction <add>, %31, %cst_9 [0] : vector<2x8x128xf32> to vector<8x128xf32>
    %33 = arith.addf %3, %32 : vector<8x128xf32>
    %34 = vector.shape_cast %9 : vector<16x128xf32> to vector<2x8x128xf32>
    %cst_10 = arith.constant dense<0.000000e+00> : vector<8x128xf32>
    %35 = vector.multi_reduction <add>, %34, %cst_10 [0] : vector<2x8x128xf32> to vector<8x128xf32>
    %36 = arith.addf %3, %35 : vector<8x128xf32>
    %37 = vector.shape_cast %26 : vector<16x128xf32> to vector<2x8x128xf32>
    %cst_11 = arith.constant dense<0.000000e+00> : vector<8x128xf32>
    %38 = vector.multi_reduction <add>, %37, %cst_11 [0] : vector<2x8x128xf32> to vector<8x128xf32>
    %39 = arith.addf %3, %38 : vector<8x128xf32>
    %c1_i32 = arith.constant 1 : i32
    %c0_12 = arith.constant 0 : index
    %c0_13 = arith.constant 0 : index
    %c0_14 = arith.constant 0 : index
    %40 = vector.load %arg3[%c0_12, %c0_13, %c0_14] : memref<4x8x128xf32, #tpu.memory_space<vmem>>, vector<1x8x128xf32>
    %41 = vector.shape_cast %40 : vector<1x8x128xf32> to vector<8x128xf32>
    %42 = arith.addf %41, %30 : vector<8x128xf32>
    %c0_15 = arith.constant 0 : index
    %c0_16 = arith.constant 0 : index
    %c0_17 = arith.constant 0 : index
    %43 = vector.load %arg3[%c0_15, %c0_16, %c0_17] : memref<4x8x128xf32, #tpu.memory_space<vmem>>, vector<1x8x128xf32>
    %44 = vector.shape_cast %43 : vector<1x8x128xf32> to vector<8x128xf32>
    %45 = vector.shape_cast %42 : vector<8x128xf32> to vector<1x8x128xf32>
    tpu.vector_store %arg3[%c0_15, %c0_16, %c0_17], %45 {strides = array<i32>} : memref<4x8x128xf32, #tpu.memory_space<vmem>>, vector<1x8x128xf32>,
    %c1 = arith.constant 1 : index
    %c0_18 = arith.constant 0 : index
    %c0_19 = arith.constant 0 : index
    %46 = vector.load %arg3[%c1, %c0_18, %c0_19] : memref<4x8x128xf32, #tpu.memory_space<vmem>>, vector<1x8x128xf32>
    %47 = vector.shape_cast %46 : vector<1x8x128xf32> to vector<8x128xf32>
    %48 = arith.addf %47, %33 : vector<8x128xf32>
    %c1_20 = arith.constant 1 : index
    %c0_21 = arith.constant 0 : index
    %c0_22 = arith.constant 0 : index
    %49 = vector.load %arg3[%c1_20, %c0_21, %c0_22] : memref<4x8x128xf32, #tpu.memory_space<vmem>>, vector<1x8x128xf32>
    %50 = vector.shape_cast %49 : vector<1x8x128xf32> to vector<8x128xf32>
    %51 = vector.shape_cast %48 : vector<8x128xf32> to vector<1x8x128xf32>
    tpu.vector_store %arg3[%c1_20, %c0_21, %c0_22], %51 {strides = array<i32>} : memref<4x8x128xf32, #tpu.memory_space<vmem>>, vector<1x8x128xf32>,
    %c2 = arith.constant 2 : index
    %c0_23 = arith.constant 0 : index
    %c0_24 = arith.constant 0 : index
    %52 = vector.load %arg3[%c2, %c0_23, %c0_24] : memref<4x8x128xf32, #tpu.memory_space<vmem>>, vector<1x8x128xf32>
    %53 = vector.shape_cast %52 : vector<1x8x128xf32> to vector<8x128xf32>
    %54 = arith.addf %53, %36 : vector<8x128xf32>
    %c2_25 = arith.constant 2 : index
    %c0_26 = arith.constant 0 : index
    %c0_27 = arith.constant 0 : index
    %55 = vector.load %arg3[%c2_25, %c0_26, %c0_27] : memref<4x8x128xf32, #tpu.memory_space<vmem>>, vector<1x8x128xf32>
    %56 = vector.shape_cast %55 : vector<1x8x128xf32> to vector<8x128xf32>
    %57 = vector.shape_cast %54 : vector<8x128xf32> to vector<1x8x128xf32>
    tpu.vector_store %arg3[%c2_25, %c0_26, %c0_27], %57 {strides = array<i32>} : memref<4x8x128xf32, #tpu.memory_space<vmem>>, vector<1x8x128xf32>,
    %c3 = arith.constant 3 : index
    %c0_28 = arith.constant 0 : index
    %c0_29 = arith.constant 0 : index
    %58 = vector.load %arg3[%c3, %c0_28, %c0_29] : memref<4x8x128xf32, #tpu.memory_space<vmem>>, vector<1x8x128xf32>
    %59 = vector.shape_cast %58 : vector<1x8x128xf32> to vector<8x128xf32>
    %60 = arith.addf %59, %39 : vector<8x128xf32>
    %c3_30 = arith.constant 3 : index
    %c0_31 = arith.constant 0 : index
    %c0_32 = arith.constant 0 : index
    %61 = vector.load %arg3[%c3_30, %c0_31, %c0_32] : memref<4x8x128xf32, #tpu.memory_space<vmem>>, vector<1x8x128xf32>
    %62 = vector.shape_cast %61 : vector<1x8x128xf32> to vector<8x128xf32>
    %63 = vector.shape_cast %60 : vector<8x128xf32> to vector<1x8x128xf32>
    tpu.vector_store %arg3[%c3_30, %c0_31, %c0_32], %63 {strides = array<i32>} : memref<4x8x128xf32, #tpu.memory_space<vmem>>, vector<1x8x128xf32>,
    return
  }
  func.func @transform_0(%arg0: i32) -> (i32, i32) {
    %c0_i32 = arith.constant 0 : i32
    %c0_i32_0 = arith.constant 0 : i32
    return %arg0, %c0_i32 : i32, i32
  }
  func.func @transform_1(%arg0: i32) -> (i32, i32) {
    %c0_i32 = arith.constant 0 : i32
    %c0_i32_0 = arith.constant 0 : i32
    return %arg0, %c0_i32 : i32, i32
  }
  func.func @transform_2(%arg0: i32) -> (i32, i32, i32) {
    %c0_i32 = arith.constant 0 : i32
    %c0_i32_0 = arith.constant 0 : i32
    %c0_i32_1 = arith.constant 0 : i32
    %c0_i32_2 = arith.constant 0 : i32
    return %c0_i32, %c0_i32_0, %c0_i32_1 : i32, i32, i32
  }
}

</mosaic_0001>

<llo_original>
// kernel: tpu_custom_call.1
$region0: #{tpu_custom_call.1}
  #allocation0 [shape = 'u32[]', space=smem, size = 0x4, offset = 0x4, fixed_abs, tag = 'smem constant byte address 0x4 - core index']
  #allocation1 [shape = 'u32[72,128]{1,0:T(1,128)}', space=vmem, size = 0x9000, scoped, tag = 'internal scratch']
  %s0 = inlined_call_operand.hbm [shape: f32[16,128], index: 0, kind: input, shape index: {}]
  %s1 = inlined_call_operand.hbm [shape: f32[16,128], index: 1, kind: input, shape index: {}]
  %s2 = inlined_call_operand.hbm [shape: f32[4,8,128], index: 2, kind: output, shape index: {}]
  %s3 = sld [smem:[#allocation0]]
  $region30: #{tpu_custom_call.1} parent=0
    _
  %s5 = ssub.s32 1, %s3
  %s6 = scalar_select 0, %s5, %s3
  $region1: #{tpu_custom_call.1} parent=0
    #allocation2 [shape = 'u8[8192]{0}', space=vmem, size = 0x2000, scoped, tag = 'input window, operand 0, single buffered']
    #allocation3 [shape = 's32[1]{0}', space=sflag, size = 0x4, scoped, tag = 'scoped memory for tpu_custom_call.1']
    #allocation4 [shape = 's32[1]{0}', space=sflag, size = 0x4, scoped, tag = 'scoped memory for tpu_custom_call.1']
    #allocation5 [shape = 'u8[8192]{0}', space=vmem, size = 0x2000, scoped, tag = 'input window, operand 1, single buffered']
    #allocation6 [shape = 's32[1]{0}', space=sflag, size = 0x4, scoped, tag = 'scoped memory for tpu_custom_call.1']
    #allocation7 [shape = 'u8[16384]{0}', space=vmem, size = 0x4000, scoped, tag = 'output window, operand 0, single buffered']
    %7 = vsyncpa [#allocation3], 0
    %8 = vsyncpa [#allocation6], 0
    %9 = vsyncpa [#allocation4], 0
    // Predicated region
    $region2: #{tpu_custom_call.1} parent=1 // pred_check
      _
    $region3: #{tpu_custom_call.1} parent=1 // pred_check_branch
      %11 = sbr.rel (0) target = $region5
    $region4: #{tpu_custom_call.1} parent=1 // pred_region
      %13 = vsyncadd [#allocation3], 0
      %s14 = sshll.u32 %s0, 4
      %s15 = int_to_ptr.hbm [resolvable:$true] %s14
      %s16 = sshll.u32 [#allocation2], 4
      %s17 = int_to_ptr.vmem [resolvable:$true] %s16
      %22 = dma.hbm_to_vmem [thread:$0]  %s15, 256, %s17, [#allocation3], 128, 128, 8
    $region5: #{tpu_custom_call.1} parent=1 // pred_fallthru
      _
    // Predicated region
    $region6: #{tpu_custom_call.1} parent=1 // pred_check
      _
    $region7: #{tpu_custom_call.1} parent=1 // pred_check_branch
      %24 = sbr.rel (0) target = $region9
    $region8: #{tpu_custom_call.1} parent=1 // pred_region
      %26 = vsyncadd [#allocation6], 0
      %s27 = sshll.u32 %s1, 4
      %s28 = int_to_ptr.hbm [resolvable:$true] %s27
      %s29 = sshll.u32 [#allocation5], 4
      %s30 = int_to_ptr.vmem [resolvable:$true] %s29
      %35 = dma.hbm_to_vmem [thread:$0]  %s28, 256, %s30, [#allocation6], 128, 128, 8
    $region9: #{tpu_custom_call.1} parent=1 // pred_fallthru
      _
    // Predicated region
    $region10: #{tpu_custom_call.1} parent=1 // pred_check
      _
    $region11: #{tpu_custom_call.1} parent=1 // pred_check_branch
      %37 = sbr.rel (0) target = $region13
    $region12: #{tpu_custom_call.1} parent=1 // pred_region
      %39 = dma.done [#allocation3], 256
    $region13: #{tpu_custom_call.1} parent=1 // pred_fallthru
      _
    // Predicated region
    $region14: #{tpu_custom_call.1} parent=1 // pred_check
      _
    $region15: #{tpu_custom_call.1} parent=1 // pred_check_branch
      %41 = sbr.rel (0) target = $region17
    $region16: #{tpu_custom_call.1} parent=1 // pred_region
      %43 = dma.done [#allocation6], 256
    $region17: #{tpu_custom_call.1} parent=1 // pred_fallthru
      _
    %p44 = scmp.eq.s32.totalorder 0, 0
    // Predicated region
    $region18: #{tpu_custom_call.1} parent=1 // pred_check
      %p45 = pneg %p44
    $region19: #{tpu_custom_call.1} parent=1 // pred_check_branch
      %47 = sbr.rel (%p45) target = $region21
    $region20: #{tpu_custom_call.1} parent=1 // pred_region
      %48 = vst [vmem:[#allocation7] sm:$0xff] 0.0
      %49 = vst [vmem:[#allocation7 + $0x8] sm:$0xff] 0.0
      %50 = vst [vmem:[#allocation7 + $0x10] sm:$0xff] 0.0
      %51 = vst [vmem:[#allocation7 + $0x18] sm:$0xff] 0.0
    $region21: #{tpu_custom_call.1} parent=1 // pred_fallthru
      _
    %v52 = vld [vmem:[#allocation2] sm:$0xff]
    %v53 = vld [vmem:[#allocation2 + $0x8] sm:$0xff]
    %v54 = vld [vmem:[#allocation5] sm:$0xff]
    %v55 = vld [vmem:[#allocation5 + $0x8] sm:$0xff]
    %v56 = vand.u32 2147483647, %v52
    %v57 = vand.u32 2147483647, %v53
    %v58 = vsub.f32 0.0, %v56
    %v59 = vsub.f32 0.0, %v57
    %v60 = vmul.f32 %v58, 1.442695
    %v61 = vpow.pop %v60
    %v62 = vmul.f32 %v59, 1.442695
    %v63 = vpow.pop %v62
    %vm64 = vcmp.ge.f32.partialorder %v52, 0.0
    %vm65 = vcmp.ge.f32.partialorder %v53, 0.0
    %v66 = vsel %vm64, 1.0, %v61
    %v67 = vsel %vm65, 1.0, %v63
    %v68 = vadd.f32 %v61, 1.0
    %v69 = vadd.f32 %v63, 1.0
    %v70 = vrcp.pop %v68
    %v71 = vmul.f32 %v68, %v70
    %v72 = vsub.f32 1.0, %v71
    %v73 = vmul.f32 %v70, %v72
    %v74 = vadd.f32 %v70, %v73
    %vm75 = vweird.f32 %v68
    %vm76 = vweird.f32 %v70
    %vm77 = vmor %vm75, %vm76
    %v78 = vsel %vm77, %v70, %v74
    %v79 = vand.u32 2147483647, %v68
    %vm80 = vcmp.eq.f32.partialorder %v79, 8.507059e+37
    %v81 = vand.u32 %v68, 2147483648
    %v82 = vor.u32 1.1754944e-38, %v81
    %v83 = vsel %vm80, %v82, %v78
    %v84 = vmul.f32 %v66, %v83
    %v85 = vrcp.pop %v69
    %v86 = vmul.f32 %v69, %v85
    %v87 = vsub.f32 1.0, %v86
    %v88 = vmul.f32 %v85, %v87
    %v89 = vadd.f32 %v85, %v88
    %vm90 = vweird.f32 %v69
    %vm91 = vweird.f32 %v85
    %vm92 = vmor %vm90, %vm91
    %v93 = vsel %vm92, %v85, %v89
    %v94 = vand.u32 2147483647, %v69
    %vm95 = vcmp.eq.f32.partialorder %v94, 8.507059e+37
    %v96 = vand.u32 %v69, 2147483648
    %v97 = vor.u32 1.1754944e-38, %v96
    %v98 = vsel %vm95, %v97, %v93
    %v99 = vmul.f32 %v67, %v98
    %v100 = vmax.f32 %v52, 0.0
    %v101 = vmax.f32 %v53, 0.0
    %v102 = vmul.f32 %v52, %v54
    %v103 = vmul.f32 %v53, %v55
    %v104 = vsub.f32 %v100, %v102
    %v105 = vsub.f32 %v101, %v103
    %v106 = vadd.f32 %v61, 1.0
    %v107 = vlog2.pop %v106
    %v108 = vmul.f32 %v107, 0.6931472
    %v109 = vmul.f32 -0.5, %v61
    %v110 = vadd.f32 %v109, 1.0
    %v111 = vmul.f32 %v110, %v61
    %v112 = vand.u32 2147483647, %v61
    %vm113 = vcmp.lt.f32.partialorder %v112, 0.0004427343
    %v114 = vsel %vm113, %v111, %v108
    %v115 = vadd.f32 %v63, 1.0
    %v116 = vlog2.pop %v115
    %v117 = vmul.f32 %v116, 0.6931472
    %v118 = vmul.f32 -0.5, %v63
    %v119 = vadd.f32 %v118, 1.0
    %v120 = vmul.f32 %v119, %v63
    %v121 = vand.u32 2147483647, %v63
    %vm122 = vcmp.lt.f32.partialorder %v121, 0.0004427343
    %v123 = vsel %vm122, %v120, %v117
    %v124 = vadd.f32 %v104, %v114
    %v125 = vadd.f32 %v105, %v123
    %v126 = vmul.f32 %v84, %v54
    %v127 = vmul.f32 %v99, %v55
    %v128 = vadd.f32 %v126, %v127
    %v129 = vadd.f32 %v128, 0.0
    %v130 = vadd.f32 %v84, %v99
    %v131 = vadd.f32 %v130, 0.0
    %v132 = vadd.f32 %v54, %v55
    %v133 = vadd.f32 %v132, 0.0
    %v134 = vadd.f32 %v124, %v125
    %v135 = vadd.f32 %v134, 0.0
    %v136 = vld [vmem:[#allocation7] sm:$0xff]
    %v137 = vadd.f32 %v136, %v129
    %138 = vst [vmem:[#allocation7] sm:$0xff] %v137
    %s139 = scalar_lea.vmem [#allocation7], 8
    %v140 = vld [vmem:[%s139] sm:$0xff]
    %v141 = vadd.f32 %v140, %v131
    %142 = vst [vmem:[%s139] sm:$0xff] %v141
    %s143 = scalar_lea.vmem [#allocation7], 16
    %v144 = vld [vmem:[%s143] sm:$0xff]
    %v145 = vadd.f32 %v144, %v133
    %146 = vst [vmem:[%s143] sm:$0xff] %v145
    %s147 = scalar_lea.vmem [#allocation7], 24
    %v148 = vld [vmem:[%s147] sm:$0xff]
    %v149 = vadd.f32 %v148, %v135
    %150 = vst [vmem:[%s147] sm:$0xff] %v149
    // Predicated region
    $region22: #{tpu_custom_call.1} parent=1 // pred_check
      _
    $region23: #{tpu_custom_call.1} parent=1 // pred_check_branch
      %152 = sbr.rel (0) target = $region25
    $region24: #{tpu_custom_call.1} parent=1 // pred_region
      %154 = vsyncadd [#allocation4], 0
      %s155 = sshll.u32 [#allocation7], 4
      %s156 = int_to_ptr.vmem [resolvable:$true] %s155
      %s157 = sshll.u32 %s2, 4
      %s158 = int_to_ptr.hbm [resolvable:$true] %s157
      %163 = dma.vmem_to_hbm [thread:$0]  %s156, 512, %s158, [#allocation4], 128, 128, 8
    $region25: #{tpu_custom_call.1} parent=1 // pred_fallthru
      _
    // Predicated region
    $region26: #{tpu_custom_call.1} parent=1 // pred_check
      _
    $region27: #{tpu_custom_call.1} parent=1 // pred_check_branch
      %165 = sbr.rel (0) target = $region29
    $region28: #{tpu_custom_call.1} parent=1 // pred_region
      %167 = dma.done [#allocation4], 512
    $region29: #{tpu_custom_call.1} parent=1 // pred_fallthru
      _
    %168 = vsyncpa [#allocation3], 1
    %169 = vsyncpa [#allocation6], 1
    %170 = vsyncpa [#allocation4], 1

</llo_original>
